<compile_context>
chip_gen: v7x
topology: tpu7x:2x2x1
jax: 0.10.0
libtpu: 0.0.40
codegen_flags: <defaults>
</compile_context>

<pallas_src>
import functools
import math

import jax
import jax.numpy as jnp
from jax.experimental import pallas as pl
from jax.experimental.pallas import tpu as pltpu

_LOG2 = math.log(2.0)


def _pick_block(dim, candidates):
    """Largest candidate that divides `dim`, else full extent (always legal)."""
    for c in candidates:
        if dim % c == 0:
            return c
    return dim


def _bce_masked_kernel(max_len, total_elems, x_ref, t_ref, len_ref, pw_ref,
                       out_ref, loss_acc, den_acc):
    i = pl.program_id(0)      # batch-tile index
    j = pl.program_id(1)      # seq-tile index (innermost reduction axis)
    nb = pl.num_programs(0)
    nt = pl.num_programs(1)

    @pl.when((i == 0) & (j == 0))
    def _init():
        loss_acc[...] = jnp.zeros_like(loss_acc)
        den_acc[...] = jnp.zeros_like(den_acc)

    lens = len_ref[...]                                    # (bB, 1) int32

    # mask.sum() == sum(clip(length, 0, max_len)); add once per batch tile.
    @pl.when(j == 0)
    def _den():
        den_acc[...] += jnp.sum(
            jnp.clip(lens, 0, max_len).astype(jnp.float32), keepdims=True)

    x = x_ref[...].astype(jnp.float32)                     # (bB, bT)
    t = t_ref[...].astype(jnp.float32)
    bB, bT = x.shape

    col = j * bT + jax.lax.broadcasted_iota(jnp.int32, (bB, bT), 1)
    mask = (col < lens).astype(jnp.float32)

    pwm1 = pw_ref[0] - 1.0                                 # hoisted scalar

    # PyTorch's numerically-stable BCE-with-logits on raw (x, t):
    #   log_weight = (pos_weight - 1) * target + 1
    #   bce = (1 - target) * x + log_weight * (log1p(exp(-|x|)) + relu(-x))
    # Masked positions are zeroed here; their exact log(2) contribution is
    # added analytically at finalize (identical to BCE(x*mask, t*mask)).
    log_weight = pwm1 * t + 1.0
    softplus_negx = jnp.log1p(jnp.exp(-jnp.abs(x))) + jnp.maximum(-x, 0.0)
    per_elem = mask * ((1.0 - t) * x + log_weight * softplus_negx)

    loss_acc[...] += jnp.sum(per_elem, keepdims=True)

    @pl.when((i == nb - 1) & (j == nt - 1))
    def _finalize():
        den = den_acc[...]
        num = loss_acc[...] + (total_elems - den) * _LOG2
        out_ref[...] = (num / den).astype(out_ref.dtype)


def bce_loss_masked(x, target, length, pos_weight):
    """x: (B, T) logits, target: (B, T), length: (B,) int, pos_weight: scalar."""
    B, T = x.shape
    len2d = length.astype(jnp.int32).reshape(B, 1)
    pw = jnp.asarray(pos_weight, jnp.float32).reshape(1)

    # Lane-dense, (8,128)-aligned tiles; live-tile footprint stays <= ~4 MiB
    # (2 inputs x 2 pipeline buffers) so it fits every generation's scoped
    # VMEM budget (v5e 16 MiB, v6e/v7x 32 MiB) with 2-deep buffering intact.
    itemsize = max(jnp.dtype(x.dtype).itemsize, jnp.dtype(target.dtype).itemsize)
    if itemsize <= 2:
        seq_candidates = (2048, 1024, 512, 256, 128)   # bf16/fp16: wider tiles
    else:
        seq_candidates = (1024, 512, 256, 128)
    bB = _pick_block(B, (256, 128, 64, 32, 16, 8))
    bT = _pick_block(T, seq_candidates)
    grid = (B // bB, T // bT)

    cost = pl.CostEstimate(
        flops=12 * B * T,
        transcendentals=2 * B * T,
        bytes_accessed=B * T * x.dtype.itemsize
        + B * T * target.dtype.itemsize + B * 4 + 8,
    )

    out = pl.pallas_call(
        functools.partial(_bce_masked_kernel, T, float(B * T)),
        out_shape=jax.ShapeDtypeStruct((1, 1), jnp.float32),
        grid_spec=pltpu.PrefetchScalarGridSpec(
            num_scalar_prefetch=0,
            grid=grid,
            in_specs=[
                pl.BlockSpec((bB, bT), lambda i, j: (i, j)),        # x
                pl.BlockSpec((bB, bT), lambda i, j: (i, j)),        # target
                pl.BlockSpec((bB, 1), lambda i, j: (i, 0)),         # lengths
                pl.BlockSpec(memory_space=pltpu.MemorySpace.SMEM),  # pos_weight
            ],
            out_specs=pl.BlockSpec((1, 1), lambda i, j: (0, 0)),
            scratch_shapes=[pltpu.VMEM((1, 1), jnp.float32),   # running loss sum
                            pltpu.VMEM((1, 1), jnp.float32)],  # running mask sum
        ),
        # Both axes feed the same resident accumulator -> "arbitrary".
        # TODO(synk): if xprof shows the 1-slot EUP binding on v7x, split the
        # batch axis across the 2 TensorCores and combine partial sums outside.
        compiler_params=pltpu.CompilerParams(
            dimension_semantics=("arbitrary", "arbitrary")),
        cost_estimate=cost,
    )(x, target, len2d, pw)
    return out[0, 0]


def _reference(x, target, length, pos_weight):
    # Pure-JAX reference mirroring the PyTorch semantics.
    B, T = x.shape
    x = x.astype(jnp.float32)
    target = target.astype(jnp.float32)
    mask = (jnp.arange(T)[None, :] < length[:, None]).astype(jnp.float32)
    z = x * mask
    t = target * mask
    lw = (pos_weight - 1.0) * t + 1.0
    per = (1.0 - t) * z + lw * (jnp.log1p(jnp.exp(-jnp.abs(z))) + jnp.maximum(-z, 0.0))
    return jnp.sum(per) / jnp.sum(mask)


if __name__ == "__main__":
    pos_weight = 2.5  # deterministic "parameter" from __init__

    # Small shape matching the module signature (batch, max_len) = (2, 16).
    kx, kt = jax.random.split(jax.random.PRNGKey(0), 2)
    B, T = 2, 16
    x = jax.random.normal(kx, (B, T), dtype=jnp.float32) * 2.0
    target = jax.random.bernoulli(kt, 0.4, (B, T)).astype(jnp.float32)
    length = jnp.array([12, 7], dtype=jnp.int32)

    loss = bce_loss_masked(x, target, length, pos_weight)
    jax.block_until_ready(loss)
    ref = _reference(x, target, length, pos_weight)
    assert jnp.allclose(loss, ref, rtol=1e-5, atol=1e-5), (loss, ref)

    # Multi-tile path: exercises grid accumulation + native-bf16 streaming.
    kx2, kt2, kl2 = jax.random.split(jax.random.PRNGKey(1), 3)
    B2, T2 = 48, 2048
    x2 = (jax.random.normal(kx2, (B2, T2), dtype=jnp.float32) * 2.0).astype(jnp.bfloat16)
    t2 = jax.random.bernoulli(kt2, 0.4, (B2, T2)).astype(jnp.bfloat16)
    len2 = jax.random.randint(kl2, (B2,), 1, T2 + 1, dtype=jnp.int32)

    loss2 = bce_loss_masked(x2, t2, len2, pos_weight)
    jax.block_until_ready(loss2)
    ref2 = _reference(x2, t2, len2, pos_weight)
    assert jnp.allclose(loss2, ref2, rtol=1e-4, atol=1e-4), (loss2, ref2)

    print("KERNEL_OK")
</pallas_src>

<mosaic_0001>
module attributes {stable_mosaic.version = 11 : i64} {
  func.func @_bce_masked_kernel(%arg0: i32, %arg1: i32, %arg2: memref<2x16xf32, #tpu.memory_space<vmem>>, %arg3: memref<2x16xf32, #tpu.memory_space<vmem>>, %arg4: memref<2x1xi32, #tpu.memory_space<vmem>>, %arg5: memref<1xf32, #tpu.memory_space<smem>>, %arg6: memref<1x1xf32, #tpu.memory_space<vmem>>, %arg7: memref<1x1xf32, #tpu.memory_space<vmem>>, %arg8: memref<1x1xf32, #tpu.memory_space<vmem>>) attributes {dimension_semantics = [#tpu.dimension_semantics<arbitrary>, #tpu.dimension_semantics<arbitrary>], iteration_bounds = array<i64: 1, 1>, scalar_prefetch = 0 : i64, scratch_operands = 2 : i64, tpu.core_type = #tpu.core_type<tc>, window_params = [{transform_indices = @transform_0, window_bounds = array<i64: 2, 16>}, {transform_indices = @transform_1, window_bounds = array<i64: 2, 16>}, {transform_indices = @transform_2, window_bounds = array<i64: 2, 1>}, {transform_indices = @transform_3, window_bounds = array<i64: 1>}, {pipeline_mode = #tpu.pipeline_mode<synchronous>, transform_indices = @transform_4, window_bounds = array<i64: 1, 1>}]} {
    %c0_i32 = arith.constant 0 : i32
    %0 = arith.cmpi eq, %arg0, %c0_i32 : i32
    %c0_i32_0 = arith.constant 0 : i32
    %1 = arith.cmpi eq, %arg1, %c0_i32_0 : i32
    %2 = arith.andi %0, %1 : i1
    %3 = arith.extui %2 : i1 to i32
    %c0_i32_1 = arith.constant 0 : i32
    %4 = arith.cmpi ne, %3, %c0_i32_1 : i32
    scf.if %4 {
      %cst_23 = arith.constant 0.000000e+00 : f32
      %54 = vector.broadcast %cst_23 : f32 to vector<1x1xf32>
      %c0_24 = arith.constant 0 : index
      %c0_25 = arith.constant 0 : index
      %55 = vector.load %arg7[%c0_24, %c0_25] : memref<1x1xf32, #tpu.memory_space<vmem>>, vector<1x1xf32>
      tpu.vector_store %arg7[%c0_24, %c0_25], %54 {strides = array<i32>} : memref<1x1xf32, #tpu.memory_space<vmem>>, vector<1x1xf32>,
      %cst_26 = arith.constant 0.000000e+00 : f32
      %56 = vector.broadcast %cst_26 : f32 to vector<1x1xf32>
      %c0_27 = arith.constant 0 : index
      %c0_28 = arith.constant 0 : index
      %57 = vector.load %arg8[%c0_27, %c0_28] : memref<1x1xf32, #tpu.memory_space<vmem>>, vector<1x1xf32>
      tpu.vector_store %arg8[%c0_27, %c0_28], %56 {strides = array<i32>} : memref<1x1xf32, #tpu.memory_space<vmem>>, vector<1x1xf32>,
    } else {
    }
    %c0 = arith.constant 0 : index
    %c0_2 = arith.constant 0 : index
    %5 = vector.load %arg4[%c0, %c0_2] : memref<2x1xi32, #tpu.memory_space<vmem>>, vector<2x1xi32>
    %c0_i32_3 = arith.constant 0 : i32
    %6 = arith.cmpi eq, %arg1, %c0_i32_3 : i32
    %7 = arith.extui %6 : i1 to i32
    %c0_i32_4 = arith.constant 0 : i32
    %8 = arith.cmpi ne, %7, %c0_i32_4 : i32
    scf.if %8 {
      %c0_23 = arith.constant 0 : index
      %c0_24 = arith.constant 0 : index
      %54 = vector.load %arg8[%c0_23, %c0_24] : memref<1x1xf32, #tpu.memory_space<vmem>>, vector<1x1xf32>
      %c0_i32_25 = arith.constant 0 : i32
      %c16_i32_26 = arith.constant 16 : i32
      %55 = vector.broadcast %c0_i32_25 : i32 to vector<2x1xi32>
      %56 = arith.maxsi %55, %5 : vector<2x1xi32>
      %57 = vector.broadcast %c16_i32_26 : i32 to vector<2x1xi32>
      %58 = arith.minsi %57, %56 : vector<2x1xi32>
      %59 = arith.sitofp %58 : vector<2x1xi32> to vector<2x1xf32>
      %60 = vector.shape_cast %59 : vector<2x1xf32> to vector<1x2x1xf32>
      %cst_27 = arith.constant dense<0.000000e+00> : vector<1xf32>
      %61 = vector.multi_reduction <add>, %60, %cst_27 [1, 2] : vector<1x2x1xf32> to vector<1xf32>
      %62 = vector.shape_cast %61 : vector<1xf32> to vector<1x1x1xf32>
      %63 = vector.extract %62[0, 0, 0] : f32 from vector<1x1x1xf32>
      %64 = vector.broadcast %63 : f32 to vector<1x1xf32>
      %65 = arith.addf %54, %64 : vector<1x1xf32>
      %c0_28 = arith.constant 0 : index
      %c0_29 = arith.constant 0 : index
      %66 = vector.load %arg8[%c0_28, %c0_29] : memref<1x1xf32, #tpu.memory_space<vmem>>, vector<1x1xf32>
      tpu.vector_store %arg8[%c0_28, %c0_29], %65 {strides = array<i32>} : memref<1x1xf32, #tpu.memory_space<vmem>>, vector<1x1xf32>,
    } else {
    }
    %c0_5 = arith.constant 0 : index
    %c0_6 = arith.constant 0 : index
    %9 = vector.load %arg2[%c0_5, %c0_6] : memref<2x16xf32, #tpu.memory_space<vmem>>, vector<2x16xf32>
    %c0_7 = arith.constant 0 : index
    %c0_8 = arith.constant 0 : index
    %10 = vector.load %arg3[%c0_7, %c0_8] : memref<2x16xf32, #tpu.memory_space<vmem>>, vector<2x16xf32>
    %c16_i32 = arith.constant 16 : i32
    %11 = arith.muli %arg1, %c16_i32 : i32
    %12 = tpu.iota {dimensions = array<i32: 1>} : vector<2x16xi32>
    %13 = vector.broadcast %11 : i32 to vector<2x16xi32>
    %14 = arith.addi %13, %12 : vector<2x16xi32>
    %15 = vector.broadcast %5 : vector<2x1xi32> to vector<2x16xi32>
    %16 = arith.cmpi slt, %14, %15 : vector<2x16xi32>
    %17 = arith.extui %16 : vector<2x16xi1> to vector<2x16xi32>
    %18 = arith.sitofp %17 : vector<2x16xi32> to vector<2x16xf32>
    %c0_9 = arith.constant 0 : index
    %19 = memref.load %arg5[%c0_9] : memref<1xf32, #tpu.memory_space<smem>>
    %cst = arith.constant 1.000000e+00 : f32
    %20 = arith.subf %19, %cst : f32
    %21 = vector.broadcast %20 : f32 to vector<2x16xf32>
    %22 = arith.mulf %21, %10 : vector<2x16xf32>
    %cst_10 = arith.constant 1.000000e+00 : f32
    %23 = vector.broadcast %cst_10 : f32 to vector<2x16xf32>
    %24 = arith.addf %22, %23 : vector<2x16xf32>
    %25 = math.absf %9 : vector<2x16xf32>
    %cst_11 = arith.constant 0.000000e+00 : f32
    %26 = vector.broadcast %cst_11 : f32 to vector<2x16xf32>
    %27 = arith.subf %26, %25 : vector<2x16xf32>
    %28 = math.exp %27 : vector<2x16xf32>
    %29 = math.log1p %28 : vector<2x16xf32>
    %cst_12 = arith.constant 0.000000e+00 : f32
    %30 = vector.broadcast %cst_12 : f32 to vector<2x16xf32>
    %31 = arith.subf %30, %9 : vector<2x16xf32>
    %cst_13 = arith.constant 0.000000e+00 : f32
    %32 = vector.broadcast %cst_13 : f32 to vector<2x16xf32>
    %33 = arith.maximumf %31, %32 : vector<2x16xf32>
    %34 = arith.addf %29, %33 : vector<2x16xf32>
    %cst_14 = arith.constant 1.000000e+00 : f32
    %35 = vector.broadcast %cst_14 : f32 to vector<2x16xf32>
    %36 = arith.subf %35, %10 : vector<2x16xf32>
    %37 = arith.mulf %36, %9 : vector<2x16xf32>
    %38 = arith.mulf %24, %34 : vector<2x16xf32>
    %39 = arith.addf %37, %38 : vector<2x16xf32>
    %40 = arith.mulf %18, %39 : vector<2x16xf32>
    %c0_15 = arith.constant 0 : index
    %c0_16 = arith.constant 0 : index
    %41 = vector.load %arg7[%c0_15, %c0_16] : memref<1x1xf32, #tpu.memory_space<vmem>>, vector<1x1xf32>
    %42 = vector.shape_cast %40 : vector<2x16xf32> to vector<1x2x16xf32>
    %cst_17 = arith.constant dense<0.000000e+00> : vector<1xf32>
    %43 = vector.multi_reduction <add>, %42, %cst_17 [1, 2] : vector<1x2x16xf32> to vector<1xf32>
    %44 = vector.shape_cast %43 : vector<1xf32> to vector<1x1x1xf32>
    %45 = vector.extract %44[0, 0, 0] : f32 from vector<1x1x1xf32>
    %46 = vector.broadcast %45 : f32 to vector<1x1xf32>
    %47 = arith.addf %41, %46 : vector<1x1xf32>
    %c0_18 = arith.constant 0 : index
    %c0_19 = arith.constant 0 : index
    %48 = vector.load %arg7[%c0_18, %c0_19] : memref<1x1xf32, #tpu.memory_space<vmem>>, vector<1x1xf32>
    tpu.vector_store %arg7[%c0_18, %c0_19], %47 {strides = array<i32>} : memref<1x1xf32, #tpu.memory_space<vmem>>, vector<1x1xf32>,
    %c0_i32_20 = arith.constant 0 : i32
    %49 = arith.cmpi eq, %arg0, %c0_i32_20 : i32
    %c0_i32_21 = arith.constant 0 : i32
    %50 = arith.cmpi eq, %arg1, %c0_i32_21 : i32
    %51 = arith.andi %49, %50 : i1
    %52 = arith.extui %51 : i1 to i32
    %c0_i32_22 = arith.constant 0 : i32
    %53 = arith.cmpi ne, %52, %c0_i32_22 : i32
    scf.if %53 {
      %c0_23 = arith.constant 0 : index
      %c0_24 = arith.constant 0 : index
      %54 = vector.load %arg8[%c0_23, %c0_24] : memref<1x1xf32, #tpu.memory_space<vmem>>, vector<1x1xf32>
      %c0_25 = arith.constant 0 : index
      %c0_26 = arith.constant 0 : index
      %55 = vector.load %arg7[%c0_25, %c0_26] : memref<1x1xf32, #tpu.memory_space<vmem>>, vector<1x1xf32>
      %cst_27 = arith.constant 3.200000e+01 : f32
      %56 = vector.broadcast %cst_27 : f32 to vector<1x1xf32>
      %57 = arith.subf %56, %54 : vector<1x1xf32>
      %cst_28 = arith.constant 0.693147182 : f32
      %58 = vector.broadcast %cst_28 : f32 to vector<1x1xf32>
      %59 = arith.mulf %57, %58 : vector<1x1xf32>
      %60 = arith.addf %55, %59 : vector<1x1xf32>
      %61 = arith.divf %60, %54 : vector<1x1xf32>
      %c0_29 = arith.constant 0 : index
      %c0_30 = arith.constant 0 : index
      %62 = vector.load %arg6[%c0_29, %c0_30] : memref<1x1xf32, #tpu.memory_space<vmem>>, vector<1x1xf32>
      tpu.vector_store %arg6[%c0_29, %c0_30], %61 {strides = array<i32>} : memref<1x1xf32, #tpu.memory_space<vmem>>, vector<1x1xf32>,
    } else {
    }
    return
  }
  func.func @transform_0(%arg0: i32, %arg1: i32) -> (i32, i32) {
    %c0_i32 = arith.constant 0 : i32
    return %arg0, %arg1 : i32, i32
  }
  func.func @transform_1(%arg0: i32, %arg1: i32) -> (i32, i32) {
    %c0_i32 = arith.constant 0 : i32
    return %arg0, %arg1 : i32, i32
  }
  func.func @transform_2(%arg0: i32, %arg1: i32) -> (i32, i32) {
    %c0_i32 = arith.constant 0 : i32
    %c0_i32_0 = arith.constant 0 : i32
    return %arg0, %c0_i32 : i32, i32
  }
  func.func @transform_3(%arg0: i32, %arg1: i32) -> i32 {
    %c0_i32 = arith.constant 0 : i32
    %c0_i32_0 = arith.constant 0 : i32
    return %c0_i32 : i32
  }
  func.func @transform_4(%arg0: i32, %arg1: i32) -> (i32, i32) {
    %c0_i32 = arith.constant 0 : i32
    %c0_i32_0 = arith.constant 0 : i32
    %c0_i32_1 = arith.constant 0 : i32
    return %c0_i32, %c0_i32_0 : i32, i32
  }
}

</mosaic_0001>

<llo_original>
// kernel: tpu_custom_call.1
$region0: #{tpu_custom_call.1}
  #allocation0 [shape = 'u32[]', space=smem, size = 0x4, offset = 0x4, fixed_abs, tag = 'smem constant byte address 0x4 - core index']
  #allocation1 [shape = 'u32[144,128]{1,0:T(1,128)}', space=vmem, size = 0x12000, scoped, tag = 'internal scratch']
  #allocation2 [shape = 'f32[1,1]{1,0:T(1,128)}', space=vmem, size = 0x200, scoped, tag = 'scratch operand']
  #allocation3 [shape = 'f32[1,1]{1,0:T(1,128)}', space=vmem, size = 0x200, scoped, tag = 'scratch operand']
  #allocation4 [shape = 'f32[1]{0:T(128)S(6)}', space=smem, size = 0x200, scoped, tag = 'scoped memory for tpu_custom_call.1']
  %s0 = inlined_call_operand.vmem [shape: f32[2,16], index: 0, kind: input, shape index: {}]
  %s1 = inlined_call_operand.vmem [shape: f32[2,16], index: 1, kind: input, shape index: {}]
  %s2 = inlined_call_operand.vmem [shape: s32[2,1], index: 2, kind: input, shape index: {}]
  %s3 = inlined_call_operand.<no memory space> [shape: f32[1], index: 3, kind: input, shape index: {}]
  %s4 = inlined_call_operand.hbm [shape: f32[1,1], index: 4, kind: output, shape index: {}]
  %s5 = sld [smem:[#allocation0]]
  $region38: #{tpu_custom_call.1} parent=0
    _
  %s7 = ssub.s32 1, %s5
  %s8 = scalar_select 0, %s7, %s5
  %9 = sst [smem:[#allocation4]] %s3
  $region1: #{tpu_custom_call.1} parent=0
    #allocation5 [shape = 'u8[512]{0}', space=vmem, size = 0x400, scoped, tag = 'output window, operand 0, single buffered']
    #allocation6 [shape = 's32[1]{0}', space=sflag, size = 0x4, scoped, tag = 'scoped memory for tpu_custom_call.1']
    %10 = vsyncpa [#allocation6], 0
    // Predicated region
    $region2: #{tpu_custom_call.1} parent=1 // pred_check
      _
    $region3: #{tpu_custom_call.1} parent=1 // pred_check_branch
      %12 = sbr.rel (0) target = $region5
    $region4: #{tpu_custom_call.1} parent=1 // pred_region
      _
    $region5: #{tpu_custom_call.1} parent=1 // pred_fallthru
      _
    // Predicated region
    $region6: #{tpu_custom_call.1} parent=1 // pred_check
      _
    $region7: #{tpu_custom_call.1} parent=1 // pred_check_branch
      %14 = sbr.rel (0) target = $region9
    $region8: #{tpu_custom_call.1} parent=1 // pred_region
      _
    $region9: #{tpu_custom_call.1} parent=1 // pred_fallthru
      _
    // Predicated region
    $region10: #{tpu_custom_call.1} parent=1 // pred_check
      _
    $region11: #{tpu_custom_call.1} parent=1 // pred_check_branch
      %16 = sbr.rel (0) target = $region13
    $region12: #{tpu_custom_call.1} parent=1 // pred_region
      _
    $region13: #{tpu_custom_call.1} parent=1 // pred_fallthru
      _
    // Predicated region
    $region14: #{tpu_custom_call.1} parent=1 // pred_check
      _
    $region15: #{tpu_custom_call.1} parent=1 // pred_check_branch
      %18 = sbr.rel (0) target = $region17
    $region16: #{tpu_custom_call.1} parent=1 // pred_region
      _
    $region17: #{tpu_custom_call.1} parent=1 // pred_fallthru
      _
    %p19 = scmp.eq.s32.totalorder 0, 0
    %p20 = scmp.eq.s32.totalorder 0, 0
    %p21 = pnand %p19, %p20
    %p22 = pneg %p21
    // Predicated region
    $region18: #{tpu_custom_call.1} parent=1 // pred_check
      _
    $region19: #{tpu_custom_call.1} parent=1 // pred_check_branch
      %24 = sbr.rel (%p21) target = $region21
    $region20: #{tpu_custom_call.1} parent=1 // pred_region
      %vm25 = vcmask 0
      %26 = vst.msk [vmem:[#allocation2] sm:$0x1] %vm25, 0.0
      %27 = vst.msk [vmem:[#allocation3] sm:$0x1] %vm25, 0.0
    $region21: #{tpu_custom_call.1} parent=1 // pred_fallthru
      _
    %v28 = vld [vmem:[%s2] sm:$0x3]
    // Predicated region
    $region22: #{tpu_custom_call.1} parent=1 // pred_check
      %p29 = pneg %p20
    $region23: #{tpu_custom_call.1} parent=1 // pred_check_branch
      %31 = sbr.rel (%p29) target = $region25
    $region24: #{tpu_custom_call.1} parent=1 // pred_region
      %v32 = vld [vmem:[#allocation3] sm:$0x1]
      %vm33 = vcmp.gt.s32.totalorder %v28, 0
      %v34 = vsel %vm33, %v28, 0
      %vm35 = vcmp.lt.s32.totalorder %v34, 16
      %v36 = vsel %vm35, %v34, 16
      %v37 = vcvt.s32.f32 %v36
      %vm38 = vcmask 1024
      %v39 = vsel %vm38, %v37, 0.0
      %40 = vadd.xlane.f32.xlu0 %v39
      %v41 = vpop.xlane.xlu0 %40
      %v42 = vrot.slane %v41, 4
      %v43 = vadd.f32 %v41, %v42
      %v44 = vrot.slane %v43, 2
      %v45 = vadd.f32 %v43, %v44
      %v46 = vrot.slane %v45, 1
      %v47 = vadd.f32 %v45, %v46
      %s48 = vtos %v47
      %v49 = vstv %s48
      %v50 = vadd.f32 %v32, %v49
      %vm51 = vcmask 0
      %52 = vst.msk [vmem:[#allocation3] sm:$0x1] %vm51, %v50
    $region25: #{tpu_custom_call.1} parent=1 // pred_fallthru
      _
    %v53 = vld [vmem:[%s0] sm:$0x3]
    %v54 = vld [vmem:[%s1] sm:$0x3]
    %s55 = smul.u32 0, 16
    %v56 = vlaneseq
    %v57 = vand.u32 %v56, 127
    %v58 = vstv %s55
    %v59 = vadd.s32 %v58, %v57
    %60 = vset.pattern.permute.xlu0 0
    %61 = vperm.xlu0 %60, %v28
    %v62 = vpop.permute.xlu0 %61
    %vm63 = vcmp.lt.s32.totalorder %v59, %v62
    %v64 = vsel %vm63, 1, 0
    %v65 = vcvt.s32.f32 %v64
    %s66 = sld [smem:[#allocation4]]
    %s67 = ssub.f32 %s66, 1.0
    %v68 = vstv %s67
    %v69 = vmul.f32 %v68, %v54
    %v70 = vadd.f32 %v69, 1.0
    %v71 = vand.u32 2147483647, %v53
    %v72 = vsub.f32 0.0, %v71
    %v73 = vmul.f32 %v72, 1.442695
    %v74 = vpow.pop %v73
    %v75 = vadd.f32 %v74, 1.0
    %v76 = vlog2.pop %v75
    %v77 = vmul.f32 %v76, 0.6931472
    %v78 = vmul.f32 -0.5, %v74
    %v79 = vadd.f32 %v78, 1.0
    %v80 = vmul.f32 %v79, %v74
    %v81 = vand.u32 2147483647, %v74
    %vm82 = vcmp.lt.f32.partialorder %v81, 0.0004427343
    %v83 = vsel %vm82, %v80, %v77
    %v84 = vsub.f32 0.0, %v53
    %v85 = vmax.f32 %v84, 0.0
    %v86 = vadd.f32 %v83, %v85
    %v87 = vsub.f32 1.0, %v54
    %v88 = vmul.f32 %v87, %v53
    %v89 = vmul.f32 %v70, %v86
    %v90 = vadd.f32 %v88, %v89
    %v91 = vmul.f32 %v65, %v90
    %v92 = vld [vmem:[#allocation2] sm:$0x1]
    %vm93 = vcmask 123904
    %v94 = vsel %vm93, %v91, 0.0
    %95 = vadd.xlane.f32.xlu0 %v94
    %v96 = vpop.xlane.xlu0 %95
    %v97 = vrot.slane %v96, 4
    %v98 = vadd.f32 %v96, %v97
    %v99 = vrot.slane %v98, 2
    %v100 = vadd.f32 %v98, %v99
    %v101 = vrot.slane %v100, 1
    %v102 = vadd.f32 %v100, %v101
    %s103 = vtos %v102
    %v104 = vstv %s103
    %v105 = vadd.f32 %v92, %v104
    %vm106 = vcmask 0
    %107 = vst.msk [vmem:[#allocation2] sm:$0x1] %vm106, %v105
    // Predicated region
    $region26: #{tpu_custom_call.1} parent=1 // pred_check
      _
    $region27: #{tpu_custom_call.1} parent=1 // pred_check_branch
      %109 = sbr.rel (%p21) target = $region29
    $region28: #{tpu_custom_call.1} parent=1 // pred_region
      %v110 = vld [vmem:[#allocation3] sm:$0x1]
      %v111 = vld [vmem:[#allocation2] sm:$0x1]
      %v112 = vsub.f32 32.0, %v110
      %v113 = vmul.f32 %v112, 0.6931472
      %v114 = vadd.f32 %v111, %v113
      %v115 = vrcp.pop %v110
      %v116 = vmul.f32 %v114, %v115
      %117 = vst.msk [vmem:[#allocation5] sm:$0x1] %vm106, %v116
    $region29: #{tpu_custom_call.1} parent=1 // pred_fallthru
      _
    // Predicated region
    $region30: #{tpu_custom_call.1} parent=1 // pred_check
      _
    $region31: #{tpu_custom_call.1} parent=1 // pred_check_branch
      %119 = sbr.rel (0) target = $region33
    $region32: #{tpu_custom_call.1} parent=1 // pred_region
      %s121 = ssub.s32 16, 16
      %122 = vsyncadd [#allocation6], %s121
      %s124 = sshll.u32 [#allocation5], 4
      %s125 = int_to_ptr.vmem [resolvable:$true] %s124
      %127 = dma.vmem_to_hbm [thread:$0]  %s125, 16, %s4, [#allocation6]
    $region33: #{tpu_custom_call.1} parent=1 // pred_fallthru
      _
    // Predicated region
    $region34: #{tpu_custom_call.1} parent=1 // pred_check
      _
    $region35: #{tpu_custom_call.1} parent=1 // pred_check_branch
      %129 = sbr.rel (0) target = $region37
    $region36: #{tpu_custom_call.1} parent=1 // pred_region
      %130 = dma.done [#allocation6], 16
    $region37: #{tpu_custom_call.1} parent=1 // pred_fallthru
      _
    %131 = vsyncpa [#allocation6], 1

</llo_original>
